<compile_context>
chip_gen: v6e
topology: v6e:2x2x1
jax: 0.10.0
libtpu: 0.0.40
codegen_flags: <defaults>
</compile_context>

<pallas_src>
import functools
import math

import jax
import jax.numpy as jnp
from jax.experimental import pallas as pl
from jax.experimental.pallas import tpu as pltpu


def _round_up(x, m):
    return (x + m - 1) // m * m


# ----------------------------------------------------------------------------
# Chip-generation info (VMEM capacity, multi-TensorCore) — queried once.
# ----------------------------------------------------------------------------
def _chip_info():
    kind = ""
    try:
        kind = jax.devices()[0].device_kind.lower()
    except Exception:
        pass
    multi_tc = "v7" in kind                      # v7x: 2 TensorCores per chip
    vmem_cap = (64 << 20) if multi_tc else (128 << 20)
    try:
        vmem_cap = int(pltpu.get_tpu_info().vmem_capacity_bytes)
    except Exception:
        pass
    return vmem_cap, multi_tc


_VMEM_CAP_BYTES, _MULTI_TC = _chip_info()
# Tile working-set budget (double-buffered operands + accumulator) and explicit scoped
# VMEM limit: ~16 MiB / 32 MiB on v7x, 24 MiB / 64 MiB on v5e/v6e.
_TILE_VMEM_BUDGET = int(min(_VMEM_CAP_BYTES // 4, 24 << 20))
_VMEM_LIMIT_BYTES = int(min(_VMEM_CAP_BYTES // 2, 64 << 20))


# ----------------------------------------------------------------------------
# Pallas kernels
# ----------------------------------------------------------------------------
def _matmul_bias_single_kernel(a_ref, b_ref, bias_ref, *refs, relu, has_identity):
    # Single K-step: no scratch accumulator, epilogue applied directly to the output.
    if has_identity:
        id_ref, o_ref = refs
    else:
        (o_ref,) = refs
        id_ref = None
    out = jnp.dot(a_ref[...], b_ref[...], preferred_element_type=jnp.float32)
    out = out + bias_ref[...]
    if has_identity:
        out = out + id_ref[...].astype(jnp.float32)
    if relu:
        out = jnp.maximum(out, 0.0)
    o_ref[...] = out.astype(o_ref.dtype)


def _matmul_bias_multi_kernel(a_ref, b_ref, bias_ref, *refs, relu, has_identity):
    # Multi K-step fallback: f32 VMEM accumulator across the (arbitrary) K axis.
    if has_identity:
        id_ref, o_ref, acc_ref = refs
    else:
        o_ref, acc_ref = refs
        id_ref = None

    @pl.when(pl.program_id(2) == 0)
    def _init():
        acc_ref[...] = jnp.zeros_like(acc_ref)

    acc_ref[...] += jnp.dot(a_ref[...], b_ref[...],
                            preferred_element_type=jnp.float32)

    @pl.when(pl.program_id(2) == pl.num_programs(2) - 1)
    def _finalize():
        out = acc_ref[...] + bias_ref[...]
        if has_identity:
            out = out + id_ref[...].astype(jnp.float32)
        if relu:
            out = jnp.maximum(out, 0.0)
        o_ref[...] = out.astype(o_ref.dtype)


@functools.lru_cache(maxsize=None)
def _build_matmul_bias(Mp, Np, Kp, tm, tn, tk, relu, has_identity, out_dtype_name):
    out_dtype = jnp.dtype(out_dtype_name)
    single = (tk == Kp)
    if single:
        in_specs = [
            pl.BlockSpec((tm, Kp), lambda i, j: (i, 0)),     # A (bf16)
            pl.BlockSpec((Kp, tn), lambda i, j: (0, j)),     # B (bf16, scale-folded)
            pl.BlockSpec((1, tn), lambda i, j: (0, j)),      # bias (f32)
        ]
        if has_identity:
            in_specs.append(pl.BlockSpec((tm, tn), lambda i, j: (i, j)))
        kernel = functools.partial(_matmul_bias_single_kernel, relu=relu,
                                   has_identity=has_identity)
        grid = (Mp // tm, Np // tn)
        out_specs = pl.BlockSpec((tm, tn), lambda i, j: (i, j))
        scratch = []
        dims = ("parallel", "parallel")
    else:
        in_specs = [
            pl.BlockSpec((tm, tk), lambda i, j, k: (i, k)),
            pl.BlockSpec((tk, tn), lambda i, j, k: (k, j)),
            pl.BlockSpec((1, tn), lambda i, j, k: (0, j)),
        ]
        if has_identity:
            in_specs.append(pl.BlockSpec((tm, tn), lambda i, j, k: (i, j)))
        kernel = functools.partial(_matmul_bias_multi_kernel, relu=relu,
                                   has_identity=has_identity)
        grid = (Mp // tm, Np // tn, Kp // tk)
        out_specs = pl.BlockSpec((tm, tn), lambda i, j, k: (i, j))
        scratch = [pltpu.VMEM((tm, tn), jnp.float32)]
        dims = ("parallel", "parallel", "arbitrary")

    call = pl.pallas_call(
        kernel,
        out_shape=jax.ShapeDtypeStruct((Mp, Np), out_dtype),
        grid_spec=pltpu.PrefetchScalarGridSpec(
            num_scalar_prefetch=0,
            grid=grid,
            in_specs=in_specs,
            out_specs=out_specs,
            scratch_shapes=scratch,
        ),
        compiler_params=pltpu.CompilerParams(
            dimension_semantics=dims,
            vmem_limit_bytes=_VMEM_LIMIT_BYTES),
    )
    return jax.jit(call)


def _fits_vmem(tm, tn, tk, has_identity, budget):
    a = 2 * tm * tk * 2                       # A tile, bf16, double-buffered
    b = 2 * tk * tn * 2                       # B tile, bf16, double-buffered
    bias = 2 * tn * 4                         # bias, f32
    out = 2 * tm * tn * 2                     # output tile, bf16
    ident = 2 * tm * tn * 2 if has_identity else 0
    acc = tm * tn * 4                         # f32 accumulator (multi-step path)
    return a + b + bias + out + ident + acc <= budget


def _pick_tiles(M, N, K, has_identity):
    budget = _TILE_VMEM_BUDGET
    Mp = _round_up(M, 16)
    if Mp > 128:
        Mp = _round_up(Mp, 128)
        tm = 128
    else:
        tm = Mp
    Np = _round_up(N, 128)
    tn_cands = (512, 256, 128) if tm <= 32 else (256, 128)
    tn = 128
    for cand in tn_cands:
        if Np % cand == 0 and _fits_vmem(tm, cand, 128, has_identity, budget):
            tn = cand
            break
    # v7x: keep >= 2 blocks on a parallel axis so both TensorCores get work.
    if _MULTI_TC and (Mp // tm) * (Np // tn) < 2:
        if Np // 128 >= 2:
            for cand in range(Np - 128, 127, -128):
                if Np % cand == 0:
                    tn = cand
                    break
        elif Mp >= 32 and Mp % 32 == 0:
            tm = Mp // 2
    # Reduction tile: largest 128-multiple divisor of Kp that fits the VMEM budget
    # (full K => single k-step for every conv in this network).
    Kp = _round_up(K, 128)
    nkb = Kp // 128
    tk = 128
    for blocks in range(nkb, 0, -1):
        if nkb % blocks == 0 and _fits_vmem(tm, tn, blocks * 128, has_identity, budget):
            tk = blocks * 128
            break
    return Mp, Np, Kp, tm, tn, tk


def matmul_bias(a, b, bias, identity=None, relu=False, out_dtype=jnp.bfloat16):
    """(M,K)@(K,N) + bias[N] (+ identity[M,N]), optional ReLU.
    Operands run on the MXU in bf16; accumulation and epilogue in f32."""
    M, K = a.shape
    K2, N = b.shape
    assert K == K2
    Mp, Np, Kp, tm, tn, tk = _pick_tiles(M, N, K, identity is not None)
    a_p = jnp.pad(a.astype(jnp.bfloat16), ((0, Mp - M), (0, Kp - K)))
    b_p = jnp.pad(b.astype(jnp.bfloat16), ((0, Kp - K), (0, Np - N)))
    bias_p = jnp.pad(bias.astype(jnp.float32), (0, Np - N)).reshape(1, Np)
    args = [a_p, b_p, bias_p]
    if identity is not None:
        args.append(jnp.pad(identity.astype(jnp.bfloat16),
                            ((0, Mp - M), (0, Np - N))))
    fn = _build_matmul_bias(Mp, Np, Kp, tm, tn, tk, bool(relu),
                            identity is not None, jnp.dtype(out_dtype).name)
    out = fn(*args)
    return out[:M, :N]


def _max_n_kernel(*refs):
    *in_refs, o_ref = refs
    m = in_refs[0][...].astype(jnp.float32)
    for r in in_refs[1:]:
        m = jnp.maximum(m, r[...].astype(jnp.float32))
    o_ref[...] = m.astype(o_ref.dtype)


@functools.lru_cache(maxsize=None)
def _build_max_n(n, rows, tm, dtype_name):
    dtype = jnp.dtype(dtype_name)
    call = pl.pallas_call(
        _max_n_kernel,
        out_shape=jax.ShapeDtypeStruct((rows, 128), dtype),
        grid_spec=pltpu.PrefetchScalarGridSpec(
            num_scalar_prefetch=0,
            grid=(rows // tm,),
            in_specs=[pl.BlockSpec((tm, 128), lambda i: (i, 0)) for _ in range(n)],
            out_specs=pl.BlockSpec((tm, 128), lambda i: (i, 0)),
        ),
        compiler_params=pltpu.CompilerParams(
            dimension_semantics=("parallel",),
            vmem_limit_bytes=_VMEM_LIMIT_BYTES),
    )
    return jax.jit(call)


def max_n(views):
    """Elementwise max over same-shaped arrays, run lane-dense ((rows,128) blocks)."""
    shape = views[0].shape
    dtype = views[0].dtype
    total = math.prod(shape)
    rows0 = -(-total // 128)
    if rows0 <= 1024:
        tm = _round_up(rows0, 16)
        rows = tm
    else:
        tm = 512
        rows = _round_up(rows0, tm)
    padded = rows * 128
    flat = [jnp.pad(v.reshape(-1), (0, padded - total)).reshape(rows, 128)
            for v in views]
    out = _build_max_n(len(views), rows, tm, jnp.dtype(dtype).name)(*flat)
    return out.reshape(-1)[:total].reshape(shape)


# ----------------------------------------------------------------------------
# Layers built on the Pallas kernels
# ----------------------------------------------------------------------------
def conv2d_bias_act(x, w, bias, stride, pad, relu, identity=None):
    """x: (B,H,W,Cin) NHWC; w: (kh,kw,Cin,Cout) HWIO with BN scale already folded in.
    If `identity` (NHWC, output shape) is given it is added before the ReLU inside
    the matmul epilogue (fused residual)."""
    kh, kw, cin, cout = w.shape
    B, H, W, C = x.shape
    assert C == cin
    x = x.astype(jnp.bfloat16)
    xp = jnp.pad(x, ((0, 0), (pad, pad), (pad, pad), (0, 0)))
    Ho = (H + 2 * pad - kh) // stride + 1
    Wo = (W + 2 * pad - kw) // stride + 1
    # TODO(synk): im2col patches still materialized in XLA glue; an implicit-GEMM tap
    # loop inside the matmul kernel would remove this HBM round trip.
    if kh == 1 and kw == 1:
        a = xp[:, ::stride, ::stride, :].reshape(B * Ho * Wo, cin)
    else:
        cols = [xp[:, i:i + stride * (Ho - 1) + 1:stride,
                   j:j + stride * (Wo - 1) + 1:stride, :]
                for i in range(kh) for j in range(kw)]
        a = jnp.concatenate(cols, axis=-1).reshape(B * Ho * Wo, kh * kw * cin)
    id2 = None
    if identity is not None:
        assert identity.shape == (B, Ho, Wo, cout)
        id2 = identity.reshape(B * Ho * Wo, cout)
    out = matmul_bias(a, w.reshape(kh * kw * cin, cout), bias,
                      identity=id2, relu=relu, out_dtype=jnp.bfloat16)
    return out.reshape(B, Ho, Wo, cout)


def maxpool_3x3_s2_p1(x):
    """nn.MaxPool2d(3, stride=2, padding=1) as one max-of-9 Pallas pass.
    Input is post-ReLU (>=0), so zero padding is equivalent to -inf padding."""
    B, H, W, C = x.shape
    xp = jnp.pad(x, ((0, 0), (1, 1), (1, 1), (0, 0)))
    Ho = (H + 2 - 3) // 2 + 1
    Wo = (W + 2 - 3) // 2 + 1
    views = [xp[:, i:i + 2 * (Ho - 1) + 1:2, j:j + 2 * (Wo - 1) + 1:2, :]
             for i in range(3) for j in range(3)]
    return max_n(views)                               # (B, Ho, Wo, C)


# ----------------------------------------------------------------------------
# Quantization layer (EST / voxel-grid style)
# ----------------------------------------------------------------------------
def quantization_layer(events, B, C, H, W):
    """events: (N, 5) float32 with columns [x, y, t, p, b]. Returns NCHW voxel grid.
    Each event votes into its two neighboring temporal channels -> single scatter-add."""
    xs = events[:, 0].astype(jnp.int32)
    ys = events[:, 1].astype(jnp.int32)
    ts = events[:, 2]
    ps = events[:, 3]
    bs = events[:, 4].astype(jnp.int32)
    t_min = jax.ops.segment_min(ts, bs, num_segments=B)
    t_max = jax.ops.segment_max(ts, bs, num_segments=B)
    t_rng = t_max - t_min
    denom = jnp.where(jnp.isfinite(t_rng) & (t_rng > 0), t_rng, 1.0)   # empty-batch guard
    t0 = jnp.where(jnp.isfinite(t_min), t_min, 0.0)
    t_norm = (ts - t0[bs]) / denom[bs]
    t_star = t_norm * (C - 1)
    # TODO(synk): the exact EST layer uses a learned MLP temporal kernel (source not
    # provided in the module); a linear voting kernel (VoxGrid-style) is used instead.
    c0 = jnp.clip(jnp.floor(t_star), 0, C - 1)
    frac = t_star - c0
    c0i = c0.astype(jnp.int32)
    c1i = jnp.minimum(c0i + 1, C - 1)
    idx_b = jnp.concatenate([bs, bs])
    idx_c = jnp.concatenate([c0i, c1i])
    idx_y = jnp.concatenate([ys, ys])
    idx_x = jnp.concatenate([xs, xs])
    vals = jnp.concatenate([ps * (1.0 - frac), ps * frac])
    vox = jnp.zeros((B, C, H, W), jnp.float32).at[idx_b, idx_c, idx_y, idx_x].add(vals)
    return vox


# ----------------------------------------------------------------------------
# ResNet-34 classifier with modified conv1 (Cin = in_channel * voxel_dim[0]) and fc
# ----------------------------------------------------------------------------
LAYERS_CFG = [(64, 3, 1), (128, 4, 2), (256, 6, 2), (512, 3, 2)]


def make_resnet34_params(key, in_ch, num_classes):
    keys = iter(jax.random.split(key, 512))

    def conv_w(cin, cout, k):
        fan_in = k * k * cin
        return jax.random.normal(next(keys), (k, k, cin, cout),
                                 jnp.float32) * (2.0 / fan_in) ** 0.5

    def bn(c):
        gamma = 1.0 + 0.1 * jax.random.normal(next(keys), (c,), jnp.float32)
        beta = 0.1 * jax.random.normal(next(keys), (c,), jnp.float32)
        mean = 0.1 * jax.random.normal(next(keys), (c,), jnp.float32)
        var = 1.0 + 0.1 * jax.random.uniform(next(keys), (c,), jnp.float32)
        scale = gamma * jax.lax.rsqrt(var + 1e-5)     # inference-mode BN folded
        bias = beta - mean * scale
        return scale, bias

    def fold(w, scale, bias):
        # BN scale folded into the conv weights; weights pre-cast to bf16 offline.
        return (w * scale[None, None, None, :]).astype(jnp.bfloat16), bias

    stem_w, stem_b = fold(conv_w(in_ch, 64, 7), *bn(64))
    params = {"stem_w": stem_w, "stem_b": stem_b}
    cin = 64
    layers = []
    for cout, nblocks, stride in LAYERS_CFG:
        blocks = []
        for bi in range(nblocks):
            s = stride if bi == 0 else 1
            w1, b1 = fold(conv_w(cin, cout, 3), *bn(cout))
            w2, b2 = fold(conv_w(cout, cout, 3), *bn(cout))
            blk = {"w1": w1, "b1": b1, "w2": w2, "b2": b2}
            if s != 1 or cin != cout:
                dw, db = fold(conv_w(cin, cout, 1), *bn(cout))
                blk["dw"] = dw
                blk["db"] = db
            blocks.append(blk)
            cin = cout
        layers.append(blocks)
    params["layers"] = layers
    params["fc_w"] = 0.02 * jax.random.normal(next(keys), (512, num_classes), jnp.float32)
    params["fc_b"] = 0.01 * jax.random.normal(next(keys), (num_classes,), jnp.float32)
    return params


def resnet34_forward(params, vox_nchw):
    x = jnp.transpose(vox_nchw, (0, 2, 3, 1))   # NCHW -> NHWC for the Pallas kernels
    x = conv2d_bias_act(x, params["stem_w"], params["stem_b"],
                        stride=2, pad=3, relu=True)
    x = maxpool_3x3_s2_p1(x)
    for blocks, (cout, nblocks, stride0) in zip(params["layers"], LAYERS_CFG):
        for bi, blk in enumerate(blocks):
            s_ = stride0 if bi == 0 else 1
            identity = x
            out1 = conv2d_bias_act(x, blk["w1"], blk["b1"],
                                   stride=s_, pad=1, relu=True)
            if "dw" in blk:
                identity = conv2d_bias_act(x, blk["dw"], blk["db"],
                                           stride=s_, pad=0, relu=False)
            # conv2 + BN bias + residual add + ReLU fused into one Pallas epilogue
            x = conv2d_bias_act(out1, blk["w2"], blk["b2"],
                                stride=1, pad=1, relu=True, identity=identity)
    # Global average pool + FC in plain XLA: (B,512)x(512,num_classes) is far below
    # Pallas launch/pad cost.
    pooled = jnp.mean(x.astype(jnp.float32), axis=(1, 2))
    return pooled @ params["fc_w"] + params["fc_b"]


@functools.partial(jax.jit, static_argnums=(2, 3, 4, 5))
def classifier_forward(params, events, B, C, H, W):
    vox = quantization_layer(events, B, C, H, W)   # (B, C, H, W) like the PyTorch layer
    return resnet34_forward(params, vox)


# ----------------------------------------------------------------------------
if __name__ == "__main__":
    # Small shapes consistent with the module: voxel_dimension=(9, 32, 32),
    # in_channel=1 -> conv1 input channels = 9; batch=2; num_classes=10.
    B, C, H, W = 2, 9, 32, 32
    num_classes = 10
    n_events = 512

    key = jax.random.PRNGKey(0)
    k1, k2, k3, k4, k5, kp = jax.random.split(key, 6)
    ev_x = jax.random.randint(k1, (n_events,), 0, W).astype(jnp.float32)
    ev_y = jax.random.randint(k2, (n_events,), 0, H).astype(jnp.float32)
    ev_t = jnp.sort(jax.random.uniform(k3, (n_events,), dtype=jnp.float32))
    ev_p = (jax.random.randint(k4, (n_events,), 0, 2) * 2 - 1).astype(jnp.float32)
    ev_b = jax.random.randint(k5, (n_events,), 0, B).astype(jnp.float32)
    events = jnp.stack([ev_x, ev_y, ev_t, ev_p, ev_b], axis=1)  # (N, 5)

    params = make_resnet34_params(kp, in_ch=C, num_classes=num_classes)

    logits = classifier_forward(params, events, B, C, H, W)
    logits = jax.block_until_ready(logits)
    assert logits.shape == (B, num_classes)
    assert bool(jnp.all(jnp.isfinite(logits)))
    print("KERNEL_OK")
</pallas_src>

<mosaic_0001>
module attributes {stable_mosaic.version = 11 : i64} {
  func.func @_matmul_bias_single_kernel(%arg0: i32, %arg1: i32, %arg2: memref<128x512xbf16, #tpu.memory_space<vmem>>, %arg3: memref<512x128xbf16, #tpu.memory_space<vmem>>, %arg4: memref<1x128xf32, #tpu.memory_space<vmem>>, %arg5: memref<128x128xbf16, #tpu.memory_space<vmem>>) attributes {dimension_semantics = [#tpu.dimension_semantics<parallel>, #tpu.dimension_semantics<parallel>], iteration_bounds = array<i64: 4, 1>, scalar_prefetch = 0 : i64, scratch_operands = 0 : i64, tpu.core_type = #tpu.core_type<tc>, window_params = [{transform_indices = @transform_0, window_bounds = array<i64: 128, 512>}, {transform_indices = @transform_1, window_bounds = array<i64: 512, 128>}, {transform_indices = @transform_2, window_bounds = array<i64: 1, 128>}, {transform_indices = @transform_3, window_bounds = array<i64: 128, 128>}]} {
    %c0 = arith.constant 0 : index
    %c0_0 = arith.constant 0 : index
    %0 = vector.load %arg2[%c0, %c0_0] : memref<128x512xbf16, #tpu.memory_space<vmem>>, vector<128x512xbf16>
    %c0_1 = arith.constant 0 : index
    %c0_2 = arith.constant 0 : index
    %1 = vector.load %arg3[%c0_1, %c0_2] : memref<512x128xbf16, #tpu.memory_space<vmem>>, vector<512x128xbf16>
    %cst = arith.constant dense<0.000000e+00> : vector<128x128xf32>
    %2 = tpu.matmul %0, %1, %cst {dimension_numbers = #tpu.dot_dimension_numbers<[1], [0], [0], [1], [0, 0, 1, 1], [], []>} : vector<128x512xbf16>, vector<512x128xbf16>, vector<128x128xf32> -> vector<128x128xf32>
    %c0_3 = arith.constant 0 : index
    %c0_4 = arith.constant 0 : index
    %3 = vector.load %arg4[%c0_3, %c0_4] : memref<1x128xf32, #tpu.memory_space<vmem>>, vector<1x128xf32>
    %4 = vector.broadcast %3 : vector<1x128xf32> to vector<128x128xf32>
    %5 = arith.addf %2, %4 : vector<128x128xf32>
    %cst_5 = arith.constant 0.000000e+00 : f32
    %6 = vector.broadcast %cst_5 : f32 to vector<128x128xf32>
    %7 = arith.maximumf %5, %6 : vector<128x128xf32>
    %8 = arith.truncf %7 : vector<128x128xf32> to vector<128x128xbf16>
    %c0_6 = arith.constant 0 : index
    %c0_7 = arith.constant 0 : index
    %9 = vector.load %arg5[%c0_6, %c0_7] : memref<128x128xbf16, #tpu.memory_space<vmem>>, vector<128x128xbf16>
    tpu.vector_store %arg5[%c0_6, %c0_7], %8 {strides = array<i32>} : memref<128x128xbf16, #tpu.memory_space<vmem>>, vector<128x128xbf16>,
    return
  }
  func.func @transform_0(%arg0: i32, %arg1: i32) -> (i32, i32) {
    %c0_i32 = arith.constant 0 : i32
    %c0_i32_0 = arith.constant 0 : i32
    return %arg0, %c0_i32 : i32, i32
  }
  func.func @transform_1(%arg0: i32, %arg1: i32) -> (i32, i32) {
    %c0_i32 = arith.constant 0 : i32
    %c0_i32_0 = arith.constant 0 : i32
    return %c0_i32, %arg1 : i32, i32
  }
  func.func @transform_2(%arg0: i32, %arg1: i32) -> (i32, i32) {
    %c0_i32 = arith.constant 0 : i32
    %c0_i32_0 = arith.constant 0 : i32
    return %c0_i32, %arg1 : i32, i32
  }
  func.func @transform_3(%arg0: i32, %arg1: i32) -> (i32, i32) {
    %c0_i32 = arith.constant 0 : i32
    return %arg0, %arg1 : i32, i32
  }
}

</mosaic_0001>

<llo_original>
// kernel: tpu_custom_call.1
$region0: #{tpu_custom_call.1}
  #allocation0 [shape = 'u32[]', space=smem, size = 0x4, offset = 0x4, fixed_abs, tag = 'smem constant byte address 0x4 - core index']
  #allocation1 [shape = 'u32[144,128]{1,0:T(1,128)}', space=vmem, size = 0x12000, scoped, tag = 'internal scratch']
  %s0 = inlined_call_operand.hbm [shape: bf16[512,512], index: 0, kind: input, shape index: {}]
  %s1 = inlined_call_operand.hbm [shape: bf16[512,128], index: 1, kind: input, shape index: {}]
  %s2 = inlined_call_operand.vmem [shape: f32[1,128], index: 2, kind: input, shape index: {}]
  %s3 = inlined_call_operand.hbm [shape: bf16[512,128], index: 3, kind: output, shape index: {}]
  %s4 = sld [smem:[#allocation0]]
  $region53: #{tpu_custom_call.1} parent=0
    _
  %s6 = ssub.s32 1, %s4
  %s7 = scalar_select 0, %s6, %s4
  $region1: #{tpu_custom_call.1} parent=0
    #allocation2 [shape = 'u8[262144]{0}', space=vmem, size = 0x40000, scoped, tag = 'input window, operand 0']
    #allocation3 [shape = 's32[2]{0}', space=sflag, size = 0x8, scoped, tag = 'scoped memory for tpu_custom_call.1']
    #allocation4 [shape = 's32[2]{0}', space=sflag, size = 0x8, scoped, tag = 'scoped memory for tpu_custom_call.1']
    #allocation5 [shape = 'u8[131072]{0}', space=vmem, size = 0x20000, scoped, tag = 'input window, operand 1, single buffered']
    #allocation6 [shape = 's32[1]{0}', space=sflag, size = 0x4, scoped, tag = 'scoped memory for tpu_custom_call.1']
    #allocation7 [shape = 'u8[65536]{0}', space=vmem, size = 0x10000, scoped, tag = 'output window, operand 0']
    %8 = vsyncpa [#allocation3], 0
    %s9 = scalar_lea.sflag [#allocation3], 1
    %10 = vsyncpa %s9, 0
    %11 = vsyncpa [#allocation6], 0
    %12 = vsyncpa [#allocation4], 0
    %s13 = scalar_lea.sflag [#allocation4], 1
    %14 = vsyncpa %s13, 0
    loop: start=0, step=1, limit=6
    $region2: #{tpu_custom_call.1} parent=1 // loop_pre_header
      _
    $region3: #{tpu_custom_call.1} parent=1 // loop_header
      %s16 = sphi 0, %s20
      %p17 = scmp.ge.s32.totalorder %s16, 6
      %s23 = sphi 0, %s35
      %s24 = sphi 0, %s31
      %s25 = sphi 0, %s23
      %s26 = sphi 0, %s24
      %s27 = sphi 0, %s25
      %s28 = sphi 0, %s26
      %s38 = sphi 0, %s40
      %s41 = sphi 0, %s38
      %s42 = sphi 0, %s41
      %s58 = sphi 0, %s42
      %s64 = sphi 0, %s66
      %s67 = sphi 0, %s64
      %s68 = sphi 0, %s67
      %s84 = sphi 0, %s68
      %s90 = sphi 0, %s92
      %s93 = sphi 0, %s90
      %s94 = sphi 0, %s93
      %s110 = sphi 0, %s94
      %s118 = sphi 0, %s120
      %s121 = sphi 0, %s118
      %s122 = sphi 0, %s121
      %s138 = sphi 0, %s122
    $region4: #{tpu_custom_call.1} parent=1 // loop_header_branch
      %19 = sbr.rel (%p17) target = $region8
    $region5: #{tpu_custom_call.1} parent=1 // loop_body
      %s21 = ssub.s32 %s16, 1
      %s22 = ssub.s32 %s16, 2
      %s29 = sadd.s32 1, %s24
      %p30 = scmp.ge.s32.totalorder %s29, 1
      %s31 = scalar_select %p30, 0, %s29
      %s32 = sadd.s32 1, %s23
      %s33 = scalar_select %p30, %s32, %s23
      %p34 = scmp.ge.s32.totalorder %s33, 4
      %s35 = scalar_select %p34, 0, %s33
      %s36 = ssub.s32 %s23, %s35
      %p37 = scmp.eq.s32.totalorder %s36, 0
      %s39 = sadd.s32 %s38, 1
      %s40 = scalar_select %p37, %s38, %s39
      %p43 = pneg %p37
      %p44 = scmp.eq.s32.totalorder %s16, 3
      %p45 = por %p43, %p44
      %p46 = scmp.ne.s32.totalorder %s38, %s41
      %p47 = scmp.eq.s32.totalorder %s16, 0
      %p48 = por %p46, %p47
      %p49 = scmp.ne.s32.totalorder %s38, %s41
      %p50 = scmp.eq.s32.totalorder %s21, 3
      %p51 = por %p49, %p50
      %p52 = scmp.ne.s32.totalorder %s41, %s42
      %p53 = scmp.eq.s32.totalorder %s21, 0
      %p54 = por %p52, %p53
      %p55 = scmp.ne.s32.totalorder %s41, %s42
      %p56 = scmp.eq.s32.totalorder %s22, 3
      %p57 = por %p55, %p56
      %p59 = scmp.ne.s32.totalorder %s42, %s58
      %p60 = scmp.eq.s32.totalorder %s22, 0
      %p61 = por %p59, %p60
      %s62 = ssub.s32 %s24, %s31
      %p63 = scmp.eq.s32.totalorder %s62, 0
      %s65 = sadd.s32 %s64, 1
      %s66 = scalar_select %p63, %s64, %s65
      %p69 = pneg %p63
      %p70 = scmp.eq.s32.totalorder %s16, 3
      %p71 = por %p69, %p70
      %p72 = scmp.ne.s32.totalorder %s64, %s67
      %p73 = scmp.eq.s32.totalorder %s16, 0
      %p74 = por %p72, %p73
      %p75 = scmp.ne.s32.totalorder %s64, %s67
      %p76 = scmp.eq.s32.totalorder %s21, 3
      %p77 = por %p75, %p76
      %p78 = scmp.ne.s32.totalorder %s67, %s68
      %p79 = scmp.eq.s32.totalorder %s21, 0
      %p80 = por %p78, %p79
      %p81 = scmp.ne.s32.totalorder %s67, %s68
      %p82 = scmp.eq.s32.totalorder %s22, 3
      %p83 = por %p81, %p82
      %p85 = scmp.ne.s32.totalorder %s68, %s84
      %p86 = scmp.eq.s32.totalorder %s22, 0
      %p87 = por %p85, %p86
      %s88 = ssub.s32 %s24, %s31
      %p89 = scmp.eq.s32.totalorder %s88, 0
      %s91 = sadd.s32 %s90, 1
      %s92 = scalar_select %p89, %s90, %s91
      %p95 = pneg %p89
      %p96 = scmp.eq.s32.totalorder %s16, 3
      %p97 = por %p95, %p96
      %p98 = scmp.ne.s32.totalorder %s90, %s93
      %p99 = scmp.eq.s32.totalorder %s16, 0
      %p100 = por %p98, %p99
      %p101 = scmp.ne.s32.totalorder %s90, %s93
      %p102 = scmp.eq.s32.totalorder %s21, 3
      %p103 = por %p101, %p102
      %p104 = scmp.ne.s32.totalorder %s93, %s94
      %p105 = scmp.eq.s32.totalorder %s21, 0
      %p106 = por %p104, %p105
      %p107 = scmp.ne.s32.totalorder %s93, %s94
      %p108 = scmp.eq.s32.totalorder %s22, 3
      %p109 = por %p107, %p108
      %p111 = scmp.ne.s32.totalorder %s94, %s110
      %p112 = scmp.eq.s32.totalorder %s22, 0
      %p113 = por %p111, %p112
      %s114 = ssub.s32 %s23, %s35
      %s115 = ssub.s32 %s24, %s31
      %s116 = sor.u32 %s114, %s115
      %p117 = scmp.eq.s32.totalorder %s116, 0
      %s119 = sadd.s32 %s118, 1
      %s120 = scalar_select %p117, %s118, %s119
      %p123 = pneg %p117
      %p124 = scmp.eq.s32.totalorder %s16, 3
      %p125 = por %p123, %p124
      %p126 = scmp.ne.s32.totalorder %s118, %s121
      %p127 = scmp.eq.s32.totalorder %s16, 0
      %p128 = por %p126, %p127
      %p129 = scmp.ne.s32.totalorder %s118, %s121
      %p130 = scmp.eq.s32.totalorder %s21, 3
      %p131 = por %p129, %p130
      %p132 = scmp.ne.s32.totalorder %s121, %s122
      %p133 = scmp.eq.s32.totalorder %s21, 0
      %p134 = por %p132, %p133
      %p135 = scmp.ne.s32.totalorder %s121, %s122
      %p136 = scmp.eq.s32.totalorder %s22, 3
      %p137 = por %p135, %p136
      %p139 = scmp.ne.s32.totalorder %s122, %s138
      %p140 = scmp.eq.s32.totalorder %s22, 0
      %p141 = por %p139, %p140
      %p142 = scmp.le.s32.totalorder 1, %s16
      %p143 = scmp.lt.s32.totalorder %s16, 5
      %p144 = pnand %p142, %p143
      %p145 = pneg %p144
      // Predicated region
      $region9: #{tpu_custom_call.1} parent=5 // pred_check
        _
      $region10: #{tpu_custom_call.1} parent=5 // pred_check_branch
        %147 = sbr.rel (%p144) target = $region12
      $region11: #{tpu_custom_call.1} parent=5 // pred_region
        %s148 = ssub.s32 %s16, 1
        // Predicated region
        $region13: #{tpu_custom_call.1} parent=11 // pred_check
          %p149 = pneg %p80
        $region14: #{tpu_custom_call.1} parent=11 // pred_check_branch
          %151 = sbr.rel (%p149) target = $region16
        $region15: #{tpu_custom_call.1} parent=11 // pred_region
          %s153 = ssub.s32 4096, 4096
          %154 = vsyncadd [#allocation6], %s153
          %s155 = smul.addr %s26, 64
          %s156 = scalar_lea.hbm %s1, %s155
          %s157 = sshll.u32 [#allocation5], 4
          %s158 = int_to_ptr.vmem [resolvable:$true] %s157
          %163 = dma.hbm_to_vmem [thread:$0]  %s156, 4096, %s158, [#allocation6], 64, 64, 4
        $region16: #{tpu_custom_call.1} parent=11 // pred_fallthru
          _
        // Predicated region
        $region17: #{tpu_custom_call.1} parent=11 // pred_check
          %p164 = pneg %p106
        $region18: #{tpu_custom_call.1} parent=11 // pred_check_branch
          %166 = sbr.rel (%p164) target = $region20
        $region19: #{tpu_custom_call.1} parent=11 // pred_region
          %p167 = scmp.lt.s32.totalorder %s26, 0
          %s168 = scalar_select %p167, %s26, 0
          %s169 = scalar_lea.vmem %s2, %s168
        $region20: #{tpu_custom_call.1} parent=11 // pred_fallthru
          _
      $region12: #{tpu_custom_call.1} parent=5 // pred_fallthru
        _
      %p170 = scmp.lt.s32.totalorder %s16, 4
      // Predicated region
      $region21: #{tpu_custom_call.1} parent=5 // pred_check
        %p171 = pneg %p170
      $region22: #{tpu_custom_call.1} parent=5 // pred_check_branch
        %173 = sbr.rel (%p171) target = $region24
      $region23: #{tpu_custom_call.1} parent=5 // pred_region
        // Predicated region
        $region25: #{tpu_custom_call.1} parent=23 // pred_check
          %p174 = pneg %p48
        $region26: #{tpu_custom_call.1} parent=23 // pred_check_branch
          %176 = sbr.rel (%p174) target = $region28
        $region27: #{tpu_custom_call.1} parent=23 // pred_region
          %s177 = sand.u32 %s38, 1
          %s178 = scalar_lea.sflag [#allocation3], %s177
          %s179 = sand.u32 %s38, 1
          %s180 = smul.addr %s179, 256
          %s181 = scalar_lea.vmem [#allocation2], %s180
          %s182 = smul.u32 16, %s23
          %s184 = ssub.s32 4096, 4096
          %185 = vsyncadd %s178, %s184
          %s186 = smul.addr %s182, 4
          %s187 = smul.addr %s186, 64
          %s188 = scalar_lea.hbm %s0, %s187
          %s189 = sshll.u32 %s181, 4
          %s190 = int_to_ptr.vmem [resolvable:$true] %s189
          %195 = dma.hbm_to_vmem [thread:$0]  %s188, 4096, %s190, %s178, 256, 256, 16
        $region28: #{tpu_custom_call.1} parent=23 // pred_fallthru
          _
      $region24: #{tpu_custom_call.1} parent=5 // pred_fallthru
        _
      %p196 = scmp.le.s32.totalorder 1, %s16
      %p197 = scmp.lt.s32.totalorder %s16, 5
      %p198 = pnand %p196, %p197
      %p199 = pneg %p198
      // Predicated region
      $region29: #{tpu_custom_call.1} parent=5 // pred_check
        _
      $region30: #{tpu_custom_call.1} parent=5 // pred_check_branch
        %201 = sbr.rel (%p198) target = $region32
      $region31: #{tpu_custom_call.1} parent=5 // pred_region
        %s202 = ssub.s32 %s16, 1
        %s203 = sand.u32 %s41, 1
        %s204 = scalar_lea.sflag [#allocation3], %s203
        %s205 = sand.u32 %s41, 1
        %s206 = smul.addr %s205, 256
        %s207 = scalar_lea.vmem [#allocation2], %s206
        // Predicated region
        $region33: #{tpu_custom_call.1} parent=31 // pred_check
          %p208 = pneg %p54
        $region34: #{tpu_custom_call.1} parent=31 // pred_check_branch
          %210 = sbr.rel (%p208) target = $region36
        $region35: #{tpu_custom_call.1} parent=31 // pred_region
          %211 = dma.done %s204, 4096
        $region36: #{tpu_custom_call.1} parent=31 // pred_fallthru
          _
        // Predicated region
        $region37: #{tpu_custom_call.1} parent=31 // pred_check
          %p212 = pneg %p80
        $region38: #{tpu_custom_call.1} parent=31 // pred_check_branch
          %214 = sbr.rel (%p212) target = $region40
        $region39: #{tpu_custom_call.1} parent=31 // pred_region
          %215 = dma.done [#allocation6], 4096
        $region40: #{tpu_custom_call.1} parent=31 // pred_fallthru
          _
        %s216 = sand.u32 %s41, 1
        %s217 = scalar_lea.sflag [#allocation3], %s216
        %s218 = sand.u32 %s41, 1
        %s219 = smul.addr %s218, 256
        %s220 = scalar_lea.vmem [#allocation2], %s219
        %p221 = pneg %p54
        %p222 = pneg %p51
        %p223 = pneg %p80
        %p224 = pneg %p77
        %p225 = scmp.lt.s32.totalorder %s26, 0
        %s226 = scalar_select %p225, %s26, 0
        %s227 = scalar_lea.vmem %s2, %s226
        %p228 = pneg %p106
        %p229 = pneg %p103
        %p230 = pneg %p134
        %p231 = pneg %p131
        %s232 = sand.u32 %s121, 1
        %s233 = scalar_lea.sflag [#allocation4], %s232
        %s234 = sand.u32 %s121, 1
        %s235 = smul.addr %s234, 64
        %s236 = scalar_lea.vmem [#allocation7], %s235
        %s237 = smul.u32 16, %s25
        %p238 = scmp.lt.s32.totalorder %s26, 0
        %s239 = scalar_select %p238, %s26, 0
        %s240 = scalar_lea.vmem %s2, %s239
        %s241 = smul.u32 16, %s25
        %v243 = vld [vmem:[%s207] sm:$0xff]
        %v244 = vld [vmem:[%s207 + $0x8] sm:$0xff]
        %v245 = vld [vmem:[%s207 + $0x10] sm:$0xff]
        %v246 = vld [vmem:[%s207 + $0x18] sm:$0xff]
        %v247 = vld [vmem:[%s207 + $0x20] sm:$0xff]
        %v248 = vld [vmem:[%s207 + $0x28] sm:$0xff]
        %v249 = vld [vmem:[%s207 + $0x30] sm:$0xff]
        %v250 = vld [vmem:[%s207 + $0x38] sm:$0xff]
        %v251 = vld [vmem:[%s207 + $0x40] sm:$0xff]
        %v252 = vld [vmem:[%s207 + $0x48] sm:$0xff]
        %v253 = vld [vmem:[%s207 + $0x50] sm:$0xff]
        %v254 = vld [vmem:[%s207 + $0x58] sm:$0xff]
        %v255 = vld [vmem:[%s207 + $0x60] sm:$0xff]
        %v256 = vld [vmem:[%s207 + $0x68] sm:$0xff]
        %v257 = vld [vmem:[%s207 + $0x70] sm:$0xff]
        %v258 = vld [vmem:[%s207 + $0x78] sm:$0xff]
        %v259 = vld [vmem:[%s207 + $0x80] sm:$0xff]
        %v260 = vld [vmem:[%s207 + $0x88] sm:$0xff]
        %v261 = vld [vmem:[%s207 + $0x90] sm:$0xff]
        %v262 = vld [vmem:[%s207 + $0x98] sm:$0xff]
        %v263 = vld [vmem:[%s207 + $0xa0] sm:$0xff]
        %v264 = vld [vmem:[%s207 + $0xa8] sm:$0xff]
        %v265 = vld [vmem:[%s207 + $0xb0] sm:$0xff]
        %v266 = vld [vmem:[%s207 + $0xb8] sm:$0xff]
        %v267 = vld [vmem:[%s207 + $0xc0] sm:$0xff]
        %v268 = vld [vmem:[%s207 + $0xc8] sm:$0xff]
        %v269 = vld [vmem:[%s207 + $0xd0] sm:$0xff]
        %v270 = vld [vmem:[%s207 + $0xd8] sm:$0xff]
        %v271 = vld [vmem:[%s207 + $0xe0] sm:$0xff]
        %v272 = vld [vmem:[%s207 + $0xe8] sm:$0xff]
        %v273 = vld [vmem:[%s207 + $0xf0] sm:$0xff]
        %v274 = vld [vmem:[%s207 + $0xf8] sm:$0xff]
        %v275 = vld [vmem:[#allocation5] sm:$0xf]
        %v276 = vld [vmem:[#allocation5 + $0x4] sm:$0xf]
        %v277 = vld [vmem:[#allocation5 + $0x8] sm:$0xf]
        %v278 = vld [vmem:[#allocation5 + $0xc] sm:$0xf]
        %v279 = vld [vmem:[#allocation5 + $0x10] sm:$0xf]
        %v280 = vld [vmem:[#allocation5 + $0x14] sm:$0xf]
        %v281 = vld [vmem:[#allocation5 + $0x18] sm:$0xf]
        %v282 = vld [vmem:[#allocation5 + $0x1c] sm:$0xf]
        %v283 = vld [vmem:[#allocation5 + $0x20] sm:$0xf]
        %v284 = vld [vmem:[#allocation5 + $0x24] sm:$0xf]
        %v285 = vld [vmem:[#allocation5 + $0x28] sm:$0xf]
        %v286 = vld [vmem:[#allocation5 + $0x2c] sm:$0xf]
        %v287 = vld [vmem:[#allocation5 + $0x30] sm:$0xf]
        %v288 = vld [vmem:[#allocation5 + $0x34] sm:$0xf]
        %v289 = vld [vmem:[#allocation5 + $0x38] sm:$0xf]
        %v290 = vld [vmem:[#allocation5 + $0x3c] sm:$0xf]
        %v291 = vld [vmem:[#allocation5 + $0x40] sm:$0xf]
        %v292 = vld [vmem:[#allocation5 + $0x44] sm:$0xf]
        %v293 = vld [vmem:[#allocation5 + $0x48] sm:$0xf]
        %v294 = vld [vmem:[#allocation5 + $0x4c] sm:$0xf]
        %v295 = vld [vmem:[#allocation5 + $0x50] sm:$0xf]
        %v296 = vld [vmem:[#allocation5 + $0x54] sm:$0xf]
        %v297 = vld [vmem:[#allocation5 + $0x58] sm:$0xf]
        %v298 = vld [vmem:[#allocation5 + $0x5c] sm:$0xf]
        %v299 = vld [vmem:[#allocation5 + $0x60] sm:$0xf]
        %v300 = vld [vmem:[#allocation5 + $0x64] sm:$0xf]
        %v301 = vld [vmem:[#allocation5 + $0x68] sm:$0xf]
        %v302 = vld [vmem:[#allocation5 + $0x6c] sm:$0xf]
        %v303 = vld [vmem:[#allocation5 + $0x70] sm:$0xf]
        %v304 = vld [vmem:[#allocation5 + $0x74] sm:$0xf]
        %v305 = vld [vmem:[#allocation5 + $0x78] sm:$0xf]
        %v306 = vld [vmem:[#allocation5 + $0x7c] sm:$0xf]
        %v307 = vld [vmem:[#allocation5 + $0x80] sm:$0xf]
        %v308 = vld [vmem:[#allocation5 + $0x84] sm:$0xf]
        %v309 = vld [vmem:[#allocation5 + $0x88] sm:$0xf]
        %v310 = vld [vmem:[#allocation5 + $0x8c] sm:$0xf]
        %v311 = vld [vmem:[#allocation5 + $0x90] sm:$0xf]
        %v312 = vld [vmem:[#allocation5 + $0x94] sm:$0xf]
        %v313 = vld [vmem:[#allocation5 + $0x98] sm:$0xf]
        %v314 = vld [vmem:[#allocation5 + $0x9c] sm:$0xf]
        %v315 = vld [vmem:[#allocation5 + $0xa0] sm:$0xf]
        %v316 = vld [vmem:[#allocation5 + $0xa4] sm:$0xf]
        %v317 = vld [vmem:[#allocation5 + $0xa8] sm:$0xf]
        %v318 = vld [vmem:[#allocation5 + $0xac] sm:$0xf]
        %v319 = vld [vmem:[#allocation5 + $0xb0] sm:$0xf]
        %v320 = vld [vmem:[#allocation5 + $0xb4] sm:$0xf]
        %v321 = vld [vmem:[#allocation5 + $0xb8] sm:$0xf]
        %v322 = vld [vmem:[#allocation5 + $0xbc] sm:$0xf]
        %v323 = vld [vmem:[#allocation5 + $0xc0] sm:$0xf]
        %v324 = vld [vmem:[#allocation5 + $0xc4] sm:$0xf]
        %v325 = vld [vmem:[#allocation5 + $0xc8] sm:$0xf]
        %v326 = vld [vmem:[#allocation5 + $0xcc] sm:$0xf]
        %v327 = vld [vmem:[#allocation5 + $0xd0] sm:$0xf]
        %v328 = vld [vmem:[#allocation5 + $0xd4] sm:$0xf]
        %v329 = vld [vmem:[#allocation5 + $0xd8] sm:$0xf]
        %v330 = vld [vmem:[#allocation5 + $0xdc] sm:$0xf]
        %v331 = vld [vmem:[#allocation5 + $0xe0] sm:$0xf]
        %v332 = vld [vmem:[#allocation5 + $0xe4] sm:$0xf]
        %v333 = vld [vmem:[#allocation5 + $0xe8] sm:$0xf]
        %v334 = vld [vmem:[#allocation5 + $0xec] sm:$0xf]
        %v335 = vld [vmem:[#allocation5 + $0xf0] sm:$0xf]
        %v336 = vld [vmem:[#allocation5 + $0xf4] sm:$0xf]
        %v337 = vld [vmem:[#allocation5 + $0xf8] sm:$0xf]
        %v338 = vld [vmem:[#allocation5 + $0xfc] sm:$0xf]
        %v339 = vld [vmem:[%s240] sm:$0x1]
        %v341 = vlaneseq
        %v342 = vshrl.u32 %v341, 7
        %v343 = vsub.s32 0, %v342
        %v344 = vrot.slane %v339, %v343
        %v378 = vunpack.c.l.b16 %v243
        %v379 = vunpack.c.h.b16 %v243
        %v380 = vunpack.c.l.b16 %v244
        %v381 = vunpack.c.h.b16 %v244
        %v382 = vunpack.c.l.b16 %v245
        %v383 = vunpack.c.h.b16 %v245
        %v384 = vunpack.c.l.b16 %v246
        %v385 = vunpack.c.h.b16 %v246
        %v386 = vunpack.c.l.b16 %v247
        %v387 = vunpack.c.h.b16 %v247
        %v388 = vunpack.c.l.b16 %v248
        %v389 = vunpack.c.h.b16 %v248
        %v390 = vunpack.c.l.b16 %v249
        %v391 = vunpack.c.h.b16 %v249
        %v392 = vunpack.c.l.b16 %v250
        %v393 = vunpack.c.h.b16 %v250
        %v394 = vunpack.c.l.b16 %v251
        %v395 = vunpack.c.h.b16 %v251
        %v396 = vunpack.c.l.b16 %v252
        %v397 = vunpack.c.h.b16 %v252
        %v398 = vunpack.c.l.b16 %v253
        %v399 = vunpack.c.h.b16 %v253
        %v400 = vunpack.c.l.b16 %v254
        %v401 = vunpack.c.h.b16 %v254
        %v402 = vunpack.c.l.b16 %v255
        %v403 = vunpack.c.h.b16 %v255
        %v404 = vunpack.c.l.b16 %v256
        %v405 = vunpack.c.h.b16 %v256
        %v406 = vunpack.c.l.b16 %v257
        %v407 = vunpack.c.h.b16 %v257
        %v408 = vunpack.c.l.b16 %v258
        %v409 = vunpack.c.h.b16 %v258
        %v410 = vunpack.c.l.b16 %v259
        %v411 = vunpack.c.h.b16 %v259
        %v412 = vunpack.c.l.b16 %v260
        %v413 = vunpack.c.h.b16 %v260
        %v414 = vunpack.c.l.b16 %v261
        %v415 = vunpack.c.h.b16 %v261
        %v416 = vunpack.c.l.b16 %v262
        %v417 = vunpack.c.h.b16 %v262
        %v418 = vunpack.c.l.b16 %v263
        %v419 = vunpack.c.h.b16 %v263
        %v420 = vunpack.c.l.b16 %v264
        %v421 = vunpack.c.h.b16 %v264
        %v422 = vunpack.c.l.b16 %v265
        %v423 = vunpack.c.h.b16 %v265
        %v424 = vunpack.c.l.b16 %v266
        %v425 = vunpack.c.h.b16 %v266
        %v426 = vunpack.c.l.b16 %v267
        %v427 = vunpack.c.h.b16 %v267
        %v428 = vunpack.c.l.b16 %v268
        %v429 = vunpack.c.h.b16 %v268
        %v430 = vunpack.c.l.b16 %v269
        %v431 = vunpack.c.h.b16 %v269
        %v432 = vunpack.c.l.b16 %v270
        %v433 = vunpack.c.h.b16 %v270
        %v434 = vunpack.c.l.b16 %v271
        %v435 = vunpack.c.h.b16 %v271
        %v436 = vunpack.c.l.b16 %v272
        %v437 = vunpack.c.h.b16 %v272
        %v438 = vunpack.c.l.b16 %v273
        %v439 = vunpack.c.h.b16 %v273
        %v440 = vunpack.c.l.b16 %v274
        %v441 = vunpack.c.h.b16 %v274
        %v442 = vpack.c.b16 %v382, %v378
        %v443 = vpack.c.b16 %v383, %v379
        %v444 = vpack.c.b16 %v384, %v380
        %v445 = vpack.c.b16 %v385, %v381
        %v446 = vpack.c.b16 %v390, %v386
        %v447 = vpack.c.b16 %v391, %v387
        %v448 = vpack.c.b16 %v392, %v388
        %v449 = vpack.c.b16 %v393, %v389
        %v450 = vpack.c.b16 %v398, %v394
        %v451 = vpack.c.b16 %v399, %v395
        %v452 = vpack.c.b16 %v400, %v396
        %v453 = vpack.c.b16 %v401, %v397
        %v454 = vpack.c.b16 %v406, %v402
        %v455 = vpack.c.b16 %v407, %v403
        %v456 = vpack.c.b16 %v408, %v404
        %v457 = vpack.c.b16 %v409, %v405
        %v458 = vpack.c.b16 %v414, %v410
        %v459 = vpack.c.b16 %v415, %v411
        %v460 = vpack.c.b16 %v416, %v412
        %v461 = vpack.c.b16 %v417, %v413
        %v462 = vpack.c.b16 %v422, %v418
        %v463 = vpack.c.b16 %v423, %v419
        %v464 = vpack.c.b16 %v424, %v420
        %v465 = vpack.c.b16 %v425, %v421
        %v466 = vpack.c.b16 %v430, %v426
        %v467 = vpack.c.b16 %v431, %v427
        %v468 = vpack.c.b16 %v432, %v428
        %v469 = vpack.c.b16 %v433, %v429
        %v470 = vpack.c.b16 %v438, %v434
        %v471 = vpack.c.b16 %v439, %v435
        %v472 = vpack.c.b16 %v440, %v436
        %v473 = vpack.c.b16 %v441, %v437
        %v570 = vunpack.c.l.b16 %v275
        %v571 = vunpack.c.l.b16 %v276
        %v572 = vunpack.c.l.b16 %v277
        %v573 = vunpack.c.l.b16 %v278
        %v574 = vunpack.c.l.b16 %v279
        %v575 = vunpack.c.l.b16 %v280
        %v576 = vunpack.c.l.b16 %v281
        %v577 = vunpack.c.l.b16 %v282
        %v578 = vunpack.c.l.b16 %v283
        %v579 = vunpack.c.l.b16 %v284
        %v580 = vunpack.c.l.b16 %v285
        %v581 = vunpack.c.l.b16 %v286
        %v582 = vunpack.c.l.b16 %v287
        %v583 = vunpack.c.l.b16 %v288
        %v584 = vunpack.c.l.b16 %v289
        %v585 = vunpack.c.l.b16 %v290
        %v586 = vunpack.c.l.b16 %v291
        %v587 = vunpack.c.l.b16 %v292
        %v588 = vunpack.c.l.b16 %v293
        %v589 = vunpack.c.l.b16 %v294
        %v590 = vunpack.c.l.b16 %v295
        %v591 = vunpack.c.l.b16 %v296
        %v592 = vunpack.c.l.b16 %v297
        %v593 = vunpack.c.l.b16 %v298
        %v594 = vunpack.c.l.b16 %v299
        %v595 = vunpack.c.l.b16 %v300
        %v596 = vunpack.c.l.b16 %v301
        %v597 = vunpack.c.l.b16 %v302
        %v598 = vunpack.c.l.b16 %v303
        %v599 = vunpack.c.l.b16 %v304
        %v600 = vunpack.c.l.b16 %v305
        %v601 = vunpack.c.l.b16 %v306
        %v602 = vunpack.c.l.b16 %v307
        %v603 = vunpack.c.l.b16 %v308
        %v604 = vunpack.c.l.b16 %v309
        %v605 = vunpack.c.l.b16 %v310
        %v606 = vunpack.c.l.b16 %v311
        %v607 = vunpack.c.l.b16 %v312
        %v608 = vunpack.c.l.b16 %v313
        %v609 = vunpack.c.l.b16 %v314
        %v610 = vunpack.c.l.b16 %v315
        %v611 = vunpack.c.l.b16 %v316
        %v612 = vunpack.c.l.b16 %v317
        %v613 = vunpack.c.l.b16 %v318
        %v614 = vunpack.c.l.b16 %v319
        %v615 = vunpack.c.l.b16 %v320
        %v616 = vunpack.c.l.b16 %v321
        %v617 = vunpack.c.l.b16 %v322
        %v618 = vunpack.c.l.b16 %v323
        %v619 = vunpack.c.l.b16 %v324
        %v620 = vunpack.c.l.b16 %v325
        %v621 = vunpack.c.l.b16 %v326
        %v622 = vunpack.c.l.b16 %v327
        %v623 = vunpack.c.l.b16 %v328
        %v624 = vunpack.c.l.b16 %v329
        %v625 = vunpack.c.l.b16 %v330
        %v626 = vunpack.c.l.b16 %v331
        %v627 = vunpack.c.l.b16 %v332
        %v628 = vunpack.c.l.b16 %v333
        %v629 = vunpack.c.l.b16 %v334
        %v630 = vunpack.c.l.b16 %v335
        %v631 = vunpack.c.l.b16 %v336
        %v632 = vunpack.c.l.b16 %v337
        %v633 = vunpack.c.l.b16 %v338
        %v634 = vpack.c.b16 %v571, %v570
        %v635 = vpack.c.b16 %v573, %v572
        %v636 = vpack.c.b16 %v575, %v574
        %v637 = vpack.c.b16 %v577, %v576
        %v638 = vpack.c.b16 %v579, %v578
        %v639 = vpack.c.b16 %v581, %v580
        %v640 = vpack.c.b16 %v583, %v582
        %v641 = vpack.c.b16 %v585, %v584
        %v642 = vpack.c.b16 %v587, %v586
        %v643 = vpack.c.b16 %v589, %v588
        %v644 = vpack.c.b16 %v591, %v590
        %v645 = vpack.c.b16 %v593, %v592
        %v646 = vpack.c.b16 %v595, %v594
        %v647 = vpack.c.b16 %v597, %v596
        %v648 = vpack.c.b16 %v599, %v598
        %v649 = vpack.c.b16 %v601, %v600
        %v650 = vpack.c.b16 %v603, %v602
        %v651 = vpack.c.b16 %v605, %v604
        %v652 = vpack.c.b16 %v607, %v606
        %v653 = vpack.c.b16 %v609, %v608
        %v654 = vpack.c.b16 %v611, %v610
        %v655 = vpack.c.b16 %v613, %v612
        %v656 = vpack.c.b16 %v615, %v614
        %v657 = vpack.c.b16 %v617, %v616
        %v658 = vpack.c.b16 %v619, %v618
        %v659 = vpack.c.b16 %v621, %v620
        %v660 = vpack.c.b16 %v623, %v622
        %v661 = vpack.c.b16 %v625, %v624
        %v662 = vpack.c.b16 %v627, %v626
        %v663 = vpack.c.b16 %v629, %v628
        %v664 = vpack.c.b16 %v631, %v630
        %v665 = vpack.c.b16 %v633, %v632
        %698 = vmatprep.subr.bf16.mxu0 0
        %699 = vmatpush1.bf16.msra.mxu0 %v641
        %700 = vmatprep.subr.bf16.mxu0 0
        %701 = vmatpush1.bf16.msra.mxu0 %v640
        %702 = vmatprep.subr.bf16.mxu0 0
        %703 = vmatpush1.bf16.msra.mxu0 %v639
        %704 = vmatprep.subr.bf16.mxu0 0
        %705 = vmatpush1.bf16.msra.mxu0 %v638
        %706 = vmatprep.subr.bf16.mxu0 0
        %707 = vmatpush1.bf16.msra.mxu0 %v637
        %708 = vmatprep.subr.bf16.mxu0 0
        %709 = vmatpush1.bf16.msra.mxu0 %v636
        %710 = vmatprep.subr.bf16.mxu0 0
        %711 = vmatpush1.bf16.msra.mxu0 %v635
        %712 = vmatprep.subr.bf16.mxu0 0
        %713 = vmatpush1.bf16.msra.mxu0 %v634
        %714 = vmatprep.subr.bf16.mxu0 0
        %715 = vmatpush2.bf16.msra.mxu0 %v649
        %716 = vmatprep.subr.bf16.mxu0 0
        %717 = vmatpush2.bf16.msra.mxu0 %v648
        %718 = vmatprep.subr.bf16.mxu0 0
        %719 = vmatpush2.bf16.msra.mxu0 %v647
        %720 = vmatprep.subr.bf16.mxu0 0
        %721 = vmatpush2.bf16.msra.mxu0 %v646
        %722 = vmatprep.subr.bf16.mxu0 0
        %723 = vmatpush2.bf16.msra.mxu0 %v645
        %724 = vmatprep.subr.bf16.mxu0 0
        %725 = vmatpush2.bf16.msra.mxu0 %v644
        %726 = vmatprep.subr.bf16.mxu0 0
        %727 = vmatpush2.bf16.msra.mxu0 %v643
        %728 = vmatprep.subr.bf16.mxu0 0
        %729 = vmatpush2.bf16.msra.mxu0 %v642
        %730 = vmatprep.mubr.bf16.mxu0 %v443
        %731 = vmatmul.mubr.bf16.gmra.mxu0 %v442
        %v732 = vpop.f32.mrf.mxu0
        %v733 = vadd.f32 %v344, %v732
        %v734 = vpop.f32.mrf.mxu0
        %v735 = vpop.f32.mrf.mxu0
        %v736 = vadd.f32 %v344, %v735
        %v737 = vpop.f32.mrf.mxu0
        %738 = vmatprep.mubr.bf16.mxu0 %v447
        %739 = vmatmul.mubr.bf16.gmra.mxu0 %v446
        %v740 = vpop.f32.mrf.mxu0
        %v741 = vadd.f32 %v344, %v740
        %v742 = vpop.f32.mrf.mxu0
        %v743 = vpop.f32.mrf.mxu0
        %v744 = vadd.f32 %v344, %v743
        %v745 = vpop.f32.mrf.mxu0
        %746 = vmatprep.mubr.bf16.mxu0 %v451
        %747 = vmatmul.mubr.bf16.gmra.mxu0 %v450
        %v748 = vpop.f32.mrf.mxu0
        %v749 = vadd.f32 %v344, %v748
        %v750 = vpop.f32.mrf.mxu0
        %v751 = vpop.f32.mrf.mxu0
        %v752 = vadd.f32 %v344, %v751
        %v753 = vpop.f32.mrf.mxu0
        %754 = vmatprep.mubr.bf16.mxu0 %v455
        %755 = vmatmul.mubr.bf16.gmra.mxu0 %v454
        %v756 = vpop.f32.mrf.mxu0
        %v757 = vadd.f32 %v344, %v756
        %v758 = vpop.f32.mrf.mxu0
        %v759 = vpop.f32.mrf.mxu0
        %v760 = vadd.f32 %v344, %v759
        %v761 = vpop.f32.mrf.mxu0
        %762 = vmatprep.mubr.bf16.mxu0 %v459
        %763 = vmatmul.mubr.bf16.gmra.mxu0 %v458
        %v764 = vpop.f32.mrf.mxu0
        %v765 = vadd.f32 %v344, %v764
        %v766 = vpop.f32.mrf.mxu0
        %v767 = vpop.f32.mrf.mxu0
        %v768 = vadd.f32 %v344, %v767
        %v769 = vpop.f32.mrf.mxu0
        %770 = vmatprep.mubr.bf16.mxu0 %v463
        %771 = vmatmul.mubr.bf16.gmra.mxu0 %v462
        %v772 = vpop.f32.mrf.mxu0
        %v773 = vadd.f32 %v344, %v772
        %v774 = vpop.f32.mrf.mxu0
        %v775 = vpop.f32.mrf.mxu0
        %v776 = vadd.f32 %v344, %v775
        %v777 = vpop.f32.mrf.mxu0
        %778 = vmatprep.mubr.bf16.mxu0 %v467
        %779 = vmatmul.mubr.bf16.gmra.mxu0 %v466
        %v780 = vpop.f32.mrf.mxu0
        %v781 = vadd.f32 %v344, %v780
        %v782 = vpop.f32.mrf.mxu0
        %v783 = vpop.f32.mrf.mxu0
        %v784 = vadd.f32 %v344, %v783
        %v785 = vpop.f32.mrf.mxu0
        %786 = vmatprep.mubr.bf16.mxu0 %v471
        %787 = vmatmul.mubr.bf16.gmra.mxu0 %v470
        %v788 = vpop.f32.mrf.mxu0
        %v789 = vadd.f32 %v344, %v788
        %v790 = vpop.f32.mrf.mxu0
        %v791 = vpop.f32.mrf.mxu0
        %v792 = vadd.f32 %v344, %v791
        %v793 = vpop.f32.mrf.mxu0
        %794 = vdwg.mxu0
        %795 = vmatprep.subr.bf16.mxu0 0
        %796 = vmatpush1.bf16.msra.mxu0 %v657
        %797 = vmatprep.subr.bf16.mxu0 0
        %798 = vmatpush1.bf16.msra.mxu0 %v656
        %799 = vmatprep.subr.bf16.mxu0 0
        %800 = vmatpush1.bf16.msra.mxu0 %v655
        %801 = vmatprep.subr.bf16.mxu0 0
        %802 = vmatpush1.bf16.msra.mxu0 %v654
        %803 = vmatprep.subr.bf16.mxu0 0
        %804 = vmatpush1.bf16.msra.mxu0 %v653
        %805 = vmatprep.subr.bf16.mxu0 0
        %806 = vmatpush1.bf16.msra.mxu0 %v652
        %807 = vmatprep.subr.bf16.mxu0 0
        %808 = vmatpush1.bf16.msra.mxu0 %v651
        %809 = vmatprep.subr.bf16.mxu0 0
        %810 = vmatpush1.bf16.msra.mxu0 %v650
        %811 = vmatprep.subr.bf16.mxu0 0
        %812 = vmatpush2.bf16.msra.mxu0 %v665
        %813 = vmatprep.subr.bf16.mxu0 0
        %814 = vmatpush2.bf16.msra.mxu0 %v664
        %815 = vmatprep.subr.bf16.mxu0 0
        %816 = vmatpush2.bf16.msra.mxu0 %v663
        %817 = vmatprep.subr.bf16.mxu0 0
        %818 = vmatpush2.bf16.msra.mxu0 %v662
        %819 = vmatprep.subr.bf16.mxu0 0
        %820 = vmatpush2.bf16.msra.mxu0 %v661
        %821 = vmatprep.subr.bf16.mxu0 0
        %822 = vmatpush2.bf16.msra.mxu0 %v660
        %823 = vmatprep.subr.bf16.mxu0 0
        %824 = vmatpush2.bf16.msra.mxu0 %v659
        %825 = vmatprep.subr.bf16.mxu0 0
        %826 = vmatpush2.bf16.msra.mxu0 %v658
        %827 = vmatprep.mubr.bf16.mxu0 %v445
        %828 = vmatmul.mubr.bf16.gmra.mxu0 %v444
        %v829 = vpop.f32.mrf.mxu0
        %v830 = vadd.f32 %v733, %v829
        %v831 = vpop.f32.mrf.mxu0
        %v832 = vpop.f32.mrf.mxu0
        %v833 = vadd.f32 %v736, %v832
        %v834 = vpop.f32.mrf.mxu0
        %835 = vmatprep.mubr.bf16.mxu0 %v449
        %836 = vmatmul.mubr.bf16.gmra.mxu0 %v448
        %v837 = vpop.f32.mrf.mxu0
        %v838 = vadd.f32 %v741, %v837
        %v839 = vpop.f32.mrf.mxu0
        %v840 = vpop.f32.mrf.mxu0
        %v841 = vadd.f32 %v744, %v840
        %v842 = vpop.f32.mrf.mxu0
        %843 = vmatprep.mubr.bf16.mxu0 %v453
        %844 = vmatmul.mubr.bf16.gmra.mxu0 %v452
        %v845 = vpop.f32.mrf.mxu0
        %v846 = vadd.f32 %v749, %v845
        %v847 = vpop.f32.mrf.mxu0
        %v848 = vpop.f32.mrf.mxu0
        %v849 = vadd.f32 %v752, %v848
        %v850 = vpop.f32.mrf.mxu0
        %851 = vmatprep.mubr.bf16.mxu0 %v457
        %852 = vmatmul.mubr.bf16.gmra.mxu0 %v456
        %v853 = vpop.f32.mrf.mxu0
        %v854 = vadd.f32 %v757, %v853
        %v855 = vpop.f32.mrf.mxu0
        %v856 = vpop.f32.mrf.mxu0
        %v857 = vadd.f32 %v760, %v856
        %v858 = vpop.f32.mrf.mxu0
        %859 = vmatprep.mubr.bf16.mxu0 %v461
        %860 = vmatmul.mubr.bf16.gmra.mxu0 %v460
        %v861 = vpop.f32.mrf.mxu0
        %v862 = vadd.f32 %v765, %v861
        %v863 = vpop.f32.mrf.mxu0
        %v864 = vpop.f32.mrf.mxu0
        %v865 = vadd.f32 %v768, %v864
        %v866 = vpop.f32.mrf.mxu0
        %867 = vmatprep.mubr.bf16.mxu0 %v465
        %868 = vmatmul.mubr.bf16.gmra.mxu0 %v464
        %v869 = vpop.f32.mrf.mxu0
        %v870 = vadd.f32 %v773, %v869
        %v871 = vpop.f32.mrf.mxu0
        %v872 = vpop.f32.mrf.mxu0
        %v873 = vadd.f32 %v776, %v872
        %v874 = vpop.f32.mrf.mxu0
        %875 = vmatprep.mubr.bf16.mxu0 %v469
        %876 = vmatmul.mubr.bf16.gmra.mxu0 %v468
        %v877 = vpop.f32.mrf.mxu0
        %v878 = vadd.f32 %v781, %v877
        %v879 = vpop.f32.mrf.mxu0
        %v880 = vpop.f32.mrf.mxu0
        %v881 = vadd.f32 %v784, %v880
        %v882 = vpop.f32.mrf.mxu0
        %883 = vmatprep.mubr.bf16.mxu0 %v473
        %884 = vmatmul.mubr.bf16.gmra.mxu0 %v472
        %v885 = vpop.f32.mrf.mxu0
        %v886 = vadd.f32 %v789, %v885
        %v887 = vpop.f32.mrf.mxu0
        %v888 = vpop.f32.mrf.mxu0
        %v889 = vadd.f32 %v792, %v888
        %v890 = vpop.f32.mrf.mxu0
        %891 = vdwg.mxu0
        %v892 = vmax.f32 %v830, 0.0
        %v893 = vmax.f32 %v833, 0.0
        %v894 = vmax.f32 %v838, 0.0
        %v895 = vmax.f32 %v841, 0.0
        %v896 = vmax.f32 %v846, 0.0
        %v897 = vmax.f32 %v849, 0.0
        %v898 = vmax.f32 %v854, 0.0
        %v899 = vmax.f32 %v857, 0.0
        %v900 = vmax.f32 %v862, 0.0
        %v901 = vmax.f32 %v865, 0.0
        %v902 = vmax.f32 %v870, 0.0
        %v903 = vmax.f32 %v873, 0.0
        %v904 = vmax.f32 %v878, 0.0
        %v905 = vmax.f32 %v881, 0.0
        %v906 = vmax.f32 %v886, 0.0
        %v907 = vmax.f32 %v889, 0.0
        %v908 = vpack.c.bf16 %v893, %v892
        %v909 = vpack.c.bf16 %v895, %v894
        %v910 = vpack.c.bf16 %v897, %v896
        %v911 = vpack.c.bf16 %v899, %v898
        %v912 = vpack.c.bf16 %v901, %v900
        %v913 = vpack.c.bf16 %v903, %v902
        %v914 = vpack.c.bf16 %v905, %v904
        %v915 = vpack.c.bf16 %v907, %v906
        %v924 = vunpack.c.l.b16 %v908
        %v925 = vunpack.c.h.b16 %v908
        %v926 = vunpack.c.l.b16 %v909
        %v927 = vunpack.c.h.b16 %v909
        %v928 = vunpack.c.l.b16 %v910
        %v929 = vunpack.c.h.b16 %v910
        %v930 = vunpack.c.l.b16 %v911
        %v931 = vunpack.c.h.b16 %v911
        %v932 = vunpack.c.l.b16 %v912
        %v933 = vunpack.c.h.b16 %v912
        %v934 = vunpack.c.l.b16 %v913
        %v935 = vunpack.c.h.b16 %v913
        %v936 = vunpack.c.l.b16 %v914
        %v937 = vunpack.c.h.b16 %v914
        %v938 = vunpack.c.l.b16 %v915
        %v939 = vunpack.c.h.b16 %v915
        %v940 = vpack.c.b16 %v924, %v924
        %v941 = vpack.c.b16 %v925, %v925
        %v942 = vpack.c.b16 %v926, %v926
        %v943 = vpack.c.b16 %v927, %v927
        %v944 = vpack.c.b16 %v928, %v928
        %v945 = vpack.c.b16 %v929, %v929
        %v946 = vpack.c.b16 %v930, %v930
        %v947 = vpack.c.b16 %v931, %v931
        %v948 = vpack.c.b16 %v932, %v932
        %v949 = vpack.c.b16 %v933, %v933
        %v950 = vpack.c.b16 %v934, %v934
        %v951 = vpack.c.b16 %v935, %v935
        %v952 = vpack.c.b16 %v936, %v936
        %v953 = vpack.c.b16 %v937, %v937
        %v954 = vpack.c.b16 %v938, %v938
        %v955 = vpack.c.b16 %v939, %v939
        %972 = vst [vmem:[%s236] sm:$0xf] %v940
        %973 = vst [vmem:[%s236 + $0x4] sm:$0xf] %v941
        %974 = vst [vmem:[%s236 + $0x8] sm:$0xf] %v942
        %975 = vst [vmem:[%s236 + $0xc] sm:$0xf] %v943
        %976 = vst [vmem:[%s236 + $0x10] sm:$0xf] %v944
        %977 = vst [vmem:[%s236 + $0x14] sm:$0xf] %v945
        %978 = vst [vmem:[%s236 + $0x18] sm:$0xf] %v946
        %979 = vst [vmem:[%s236 + $0x1c] sm:$0xf] %v947
        %980 = vst [vmem:[%s236 + $0x20] sm:$0xf] %v948
        %981 = vst [vmem:[%s236 + $0x24] sm:$0xf] %v949
        %982 = vst [vmem:[%s236 + $0x28] sm:$0xf] %v950
        %983 = vst [vmem:[%s236 + $0x2c] sm:$0xf] %v951
        %984 = vst [vmem:[%s236 + $0x30] sm:$0xf] %v952
        %985 = vst [vmem:[%s236 + $0x34] sm:$0xf] %v953
        %986 = vst [vmem:[%s236 + $0x38] sm:$0xf] %v954
        %987 = vst [vmem:[%s236 + $0x3c] sm:$0xf] %v955
        %s988 = sand.u32 %s121, 1
        %s989 = scalar_lea.sflag [#allocation4], %s988
        %s990 = sand.u32 %s121, 1
        %s991 = smul.addr %s990, 64
        %s992 = scalar_lea.vmem [#allocation7], %s991
        // Predicated region
        $region41: #{tpu_custom_call.1} parent=31 // pred_check
          %p993 = pneg %p131
        $region42: #{tpu_custom_call.1} parent=31 // pred_check_branch
          %995 = sbr.rel (%p993) target = $region44
        $region43: #{tpu_custom_call.1} parent=31 // pred_region
          %s996 = smul.u32 16, %s25
          %s998 = ssub.s32 1024, 1024
          %999 = vsyncadd %s989, %s998
          %s1000 = sadd.s32 %s26, %s996
          %s1001 = smul.addr %s1000, 64
          %s1002 = scalar_lea.hbm %s3, %s1001
          %s1003 = sshll.u32 %s992, 4
          %s1004 = int_to_ptr.vmem [resolvable:$true] %s1003
          %1009 = dma.vmem_to_hbm [thread:$0]  %s1004, 1024, %s1002, %s989, 64, 64, 4
        $region44: #{tpu_custom_call.1} parent=31 // pred_fallthru
          _
      $region32: #{tpu_custom_call.1} parent=5 // pred_fallthru
        _
      %p1010 = scmp.le.s32.totalorder 2, %s16
      // Predicated region
      $region45: #{tpu_custom_call.1} parent=5 // pred_check
        %p1011 = pneg %p1010
      $region46: #{tpu_custom_call.1} parent=5 // pred_check_branch
        %1013 = sbr.rel (%p1011) target = $region48
      $region47: #{tpu_custom_call.1} parent=5 // pred_region
        %s1014 = ssub.s32 %s16, 2
        // Predicated region
        $region49: #{tpu_custom_call.1} parent=47 // pred_check
          %p1015 = pneg %p137
        $region50: #{tpu_custom_call.1} parent=47 // pred_check_branch
          %1017 = sbr.rel (%p1015) target = $region52
        $region51: #{tpu_custom_call.1} parent=47 // pred_region
          %s1018 = sand.u32 %s122, 1
          %s1019 = scalar_lea.sflag [#allocation4], %s1018
          %s1020 = sand.u32 %s122, 1
          %s1021 = smul.addr %s1020, 64
          %s1022 = scalar_lea.vmem [#allocation7], %s1021
          %1023 = dma.done %s1019, 1024
        $region52: #{tpu_custom_call.1} parent=47 // pred_fallthru
          _
      $region48: #{tpu_custom_call.1} parent=5 // pred_fallthru
        _
    $region6: #{tpu_custom_call.1} parent=1 // loop_footer
      %s20 = sadd.s32 1, %s16
    $region7: #{tpu_custom_call.1} parent=1 // loop_footer_branch
      %15 = sbr.rel target = $region3
    $region8: #{tpu_custom_call.1} parent=1 // loop_exit
      _
    %1024 = vsyncpa [#allocation3], 1
    %s1025 = scalar_lea.sflag [#allocation3], 1
    %1026 = vsyncpa %s1025, 1
    %1027 = vsyncpa [#allocation6], 1
    %1028 = vsyncpa [#allocation4], 1
    %s1029 = scalar_lea.sflag [#allocation4], 1
    %1030 = vsyncpa %s1029, 1

</llo_original>
